<compile_context>
chip_gen: v6e
topology: v6e:2x2x1
jax: 0.10.0
libtpu: 0.0.40
codegen_flags: <defaults>
</compile_context>

<pallas_src>
import jax
import jax.numpy as jnp
from jax.experimental import pallas as pl
from jax.experimental.pallas import tpu as pltpu


def _glu_kernel(x_ref, wa_ref, wb_ref, b_ref, o_ref):
    # x_ref: (TM, P*E) packed rows; wa_ref: (P*E, P*2H); wb_ref: (P*2H, 2*P*E)
    # b_ref: (1, 2*P*E) folded bias; o_ref: (TM, P*E)
    x = x_ref[...]
    h = jnp.dot(x, wa_ref[...], preferred_element_type=jnp.float32)
    r = jnp.dot(h, wb_ref[...], preferred_element_type=jnp.float32) + b_ref[...]
    pe = x.shape[-1]
    gate = jax.nn.sigmoid(r[:, :pe])        # exp on EUP; robust sigmoid lowering
    o_ref[...] = x + gate * (r[:, pe:] - x)  # == x*(1-gate) + value*gate


def _block_diag(w, p):
    """(a, b) -> (p*a, p*b) block-diagonal with p copies of w."""
    a, b = w.shape
    eye = jnp.eye(p, dtype=w.dtype)
    return (eye[:, None, :, None] * w[None, :, None, :]).reshape(p * a, p * b)


def glu_activation_1d(x, w1, b1, w1_2, b1_2, w2, b2, w2_2, b2_2,
                      *, pack=None, tile_rows=512):
    """x: (..., E).  Weights in x@W layout: w1,w2: (E,2E); w1_2,w2_2: (2E,E);
    biases b1,b2: (2E,); b1_2,b2_2: (E,).  (nn.Linear.weight is the transpose.)
    pack: logical rows packed per 128-lane-multiple physical row
          (default 128//E; use 256//E to fill the 256-wide MXU on v6e/v7x).
    tile_rows: packed rows per grid step (keep a few-MiB tile; v7x has 64 MiB VMEM)."""
    orig_shape, orig_dtype = x.shape, x.dtype
    E = x.shape[-1]
    H = w1.shape[1]
    assert w1.shape == (E, H) and w2.shape == (E, H)
    assert w1_2.shape == (H, E) and w2_2.shape == (H, E)

    P = pack if pack is not None else max(1, 128 // E)
    f32 = jnp.float32
    x2d = x.reshape(-1, E).astype(f32)
    R = x2d.shape[0]

    # ---- pack P logical rows per physical row; pad rows to a tile multiple ----
    Rp = pl.cdiv(R, P)                         # physical packed rows needed
    tm = tile_rows
    if Rp < tm:                                # tiny inputs: single small tile
        tm = max(8, pl.cdiv(Rp, 8) * 8)
    Rp_pad = pl.cdiv(Rp, tm) * tm
    R_pad = Rp_pad * P
    if R_pad != R:
        x2d = jnp.pad(x2d, ((0, R_pad - R), (0, 0)))
    xp = x2d.reshape(Rp_pad, P * E)            # lane-dense packed input

    # ---- fused + packed weights (built once, outside the kernel) ----
    wa = jnp.concatenate([w1, w2], axis=1).astype(f32)                    # (E, 2H)
    g_half = jnp.concatenate([w1_2.astype(f32), jnp.zeros((H, E), f32)], axis=0)  # (2H, E)
    v_half = jnp.concatenate([jnp.zeros((H, E), f32), w2_2.astype(f32)], axis=0)  # (2H, E)
    wa_p = _block_diag(wa, P)                                             # (P*E, P*2H)
    wb_p = jnp.concatenate([_block_diag(g_half, P),
                            _block_diag(v_half, P)], axis=1)              # (P*2H, 2*P*E)
    ba_p = jnp.tile(jnp.concatenate([b1, b2]).astype(f32), P)             # (P*2H,)
    bb_p = jnp.concatenate([jnp.tile(b1_2.astype(f32), P),
                            jnp.tile(b2_2.astype(f32), P)])               # (2*P*E,)
    # fold the first-stage bias into the second-stage bias (algebraically exact)
    b_fold = (ba_p @ wb_p + bb_p).reshape(1, 2 * P * E)

    full = lambda i: (0, 0)  # weights/bias: same (only) block every grid step
    out = pl.pallas_call(
        _glu_kernel,
        out_shape=jax.ShapeDtypeStruct((Rp_pad, P * E), f32),
        grid_spec=pltpu.PrefetchScalarGridSpec(
            num_scalar_prefetch=0,
            grid=(Rp_pad // tm,),
            in_specs=[
                pl.BlockSpec((tm, P * E), lambda i: (i, 0)),    # packed x rows
                pl.BlockSpec((P * E, P * 2 * H), full),         # fused stage-1 weight
                pl.BlockSpec((P * 2 * H, 2 * P * E), full),     # fused stage-2 weight
                pl.BlockSpec((1, 2 * P * E), full),             # folded bias
            ],
            out_specs=pl.BlockSpec((tm, P * E), lambda i: (i, 0)),
        ),
        compiler_params=pltpu.CompilerParams(
            # single row axis; "parallel" lets v7x shard the grid over its 2 TCs
            dimension_semantics=("parallel",),
        ),
    )(xp, wa_p, wb_p, b_fold)

    out2d = out.reshape(R_pad, E)[:R]
    return out2d.reshape(orig_shape).astype(orig_dtype)


def _reference(x, w1, b1, w1_2, b1_2, w2, b2, w2_2, b2_2):
    # Pure-JAX mirror of the PyTorch forward.
    gate = jax.nn.sigmoid((x @ w1 + b1) @ w1_2 + b1_2)
    value = (x @ w2 + b2) @ w2_2 + b2_2
    return x * (1.0 - gate) + value * gate


if __name__ == "__main__":
    # Small shapes: batch=2, seq=20, emb_dim=32 -> conv_size = 2*emb_dim = 64.
    B, N, E = 2, 20, 32
    H = 2 * E

    key = jax.random.PRNGKey(0)
    ks = jax.random.split(key, 9)
    x = jax.random.normal(ks[0], (B, N, E), dtype=jnp.float32)
    # Weights in x @ W layout (PyTorch nn.Linear.weight would be the transpose).
    w1   = jax.random.normal(ks[1], (E, H), dtype=jnp.float32) * 0.1
    b1   = jax.random.normal(ks[2], (H,),   dtype=jnp.float32) * 0.01
    w1_2 = jax.random.normal(ks[3], (H, E), dtype=jnp.float32) * 0.1
    b1_2 = jax.random.normal(ks[4], (E,),   dtype=jnp.float32) * 0.01
    w2   = jax.random.normal(ks[5], (E, H), dtype=jnp.float32) * 0.1
    b2   = jax.random.normal(ks[6], (H,),   dtype=jnp.float32) * 0.01
    w2_2 = jax.random.normal(ks[7], (H, E), dtype=jnp.float32) * 0.1
    b2_2 = jax.random.normal(ks[8], (E,),   dtype=jnp.float32) * 0.01

    out = glu_activation_1d(x, w1, b1, w1_2, b1_2, w2, b2, w2_2, b2_2)
    out = jax.block_until_ready(out)

    ref = _reference(x, w1, b1, w1_2, b1_2, w2, b2, w2_2, b2_2)
    assert out.shape == x.shape
    assert jnp.allclose(out, ref, atol=1e-4, rtol=1e-4), \
        float(jnp.max(jnp.abs(out - ref)))

    print("KERNEL_OK")
</pallas_src>

<mosaic_0001>
module attributes {stable_mosaic.version = 11 : i64} {
  func.func @_glu_kernel(%arg0: i32, %arg1: memref<16x128xf32, #tpu.memory_space<vmem>>, %arg2: memref<128x512xf32, #tpu.memory_space<vmem>>, %arg3: memref<512x256xf32, #tpu.memory_space<vmem>>, %arg4: memref<1x256xf32, #tpu.memory_space<vmem>>, %arg5: memref<16x128xf32, #tpu.memory_space<vmem>>) attributes {dimension_semantics = [#tpu.dimension_semantics<parallel>], iteration_bounds = array<i64: 1>, scalar_prefetch = 0 : i64, scratch_operands = 0 : i64, tpu.core_type = #tpu.core_type<tc>, window_params = [{transform_indices = @transform_0, window_bounds = array<i64: 16, 128>}, {pipeline_mode = #tpu.pipeline_mode<synchronous>, transform_indices = @transform_1, window_bounds = array<i64: 128, 512>}, {pipeline_mode = #tpu.pipeline_mode<synchronous>, transform_indices = @transform_2, window_bounds = array<i64: 512, 256>}, {pipeline_mode = #tpu.pipeline_mode<synchronous>, transform_indices = @transform_3, window_bounds = array<i64: 1, 256>}, {transform_indices = @transform_4, window_bounds = array<i64: 16, 128>}]} {
    %c0 = arith.constant 0 : index
    %c0_0 = arith.constant 0 : index
    %0 = vector.load %arg1[%c0, %c0_0] : memref<16x128xf32, #tpu.memory_space<vmem>>, vector<16x128xf32>
    %c0_1 = arith.constant 0 : index
    %c0_2 = arith.constant 0 : index
    %1 = vector.load %arg2[%c0_1, %c0_2] : memref<128x512xf32, #tpu.memory_space<vmem>>, vector<128x512xf32>
    %cst = arith.constant dense<0.000000e+00> : vector<16x512xf32>
    %2 = tpu.matmul %0, %1, %cst {dimension_numbers = #tpu.dot_dimension_numbers<[1], [0], [0], [1], [0, 0, 1, 1], [], []>} : vector<16x128xf32>, vector<128x512xf32>, vector<16x512xf32> -> vector<16x512xf32>
    %c0_3 = arith.constant 0 : index
    %c0_4 = arith.constant 0 : index
    %3 = vector.load %arg3[%c0_3, %c0_4] : memref<512x256xf32, #tpu.memory_space<vmem>>, vector<512x256xf32>
    %cst_5 = arith.constant dense<0.000000e+00> : vector<16x256xf32>
    %4 = tpu.matmul %2, %3, %cst_5 {dimension_numbers = #tpu.dot_dimension_numbers<[1], [0], [0], [1], [0, 0, 1, 1], [], []>} : vector<16x512xf32>, vector<512x256xf32>, vector<16x256xf32> -> vector<16x256xf32>
    %c0_6 = arith.constant 0 : index
    %c0_7 = arith.constant 0 : index
    %5 = vector.load %arg4[%c0_6, %c0_7] : memref<1x256xf32, #tpu.memory_space<vmem>>, vector<1x256xf32>
    %6 = vector.broadcast %5 : vector<1x256xf32> to vector<16x256xf32>
    %7 = arith.addf %4, %6 : vector<16x256xf32>
    %8 = vector.extract_strided_slice %7 {offsets = [0, 0], sizes = [16, 128], strides = [1, 1]} : vector<16x256xf32> to vector<16x128xf32>
    %9 = arith.negf %8 : vector<16x128xf32>
    %10 = math.exp %9 : vector<16x128xf32>
    %cst_8 = arith.constant 1.000000e+00 : f32
    %11 = vector.broadcast %cst_8 : f32 to vector<16x128xf32>
    %12 = arith.addf %11, %10 : vector<16x128xf32>
    %13 = arith.divf %11, %12 : vector<16x128xf32>
    %14 = vector.extract_strided_slice %7 {offsets = [0, 128], sizes = [16, 128], strides = [1, 1]} : vector<16x256xf32> to vector<16x128xf32>
    %15 = arith.subf %14, %0 : vector<16x128xf32>
    %16 = arith.mulf %13, %15 : vector<16x128xf32>
    %17 = arith.addf %0, %16 : vector<16x128xf32>
    %c0_9 = arith.constant 0 : index
    %c0_10 = arith.constant 0 : index
    %18 = vector.load %arg5[%c0_9, %c0_10] : memref<16x128xf32, #tpu.memory_space<vmem>>, vector<16x128xf32>
    tpu.vector_store %arg5[%c0_9, %c0_10], %17 {strides = array<i32>} : memref<16x128xf32, #tpu.memory_space<vmem>>, vector<16x128xf32>,
    return
  }
  func.func @transform_0(%arg0: i32) -> (i32, i32) {
    %c0_i32 = arith.constant 0 : i32
    %c0_i32_0 = arith.constant 0 : i32
    return %arg0, %c0_i32 : i32, i32
  }
  func.func @transform_1(%arg0: i32) -> (i32, i32) {
    %c0_i32 = arith.constant 0 : i32
    %c0_i32_0 = arith.constant 0 : i32
    %c0_i32_1 = arith.constant 0 : i32
    return %c0_i32, %c0_i32_0 : i32, i32
  }
  func.func @transform_2(%arg0: i32) -> (i32, i32) {
    %c0_i32 = arith.constant 0 : i32
    %c0_i32_0 = arith.constant 0 : i32
    %c0_i32_1 = arith.constant 0 : i32
    return %c0_i32, %c0_i32_0 : i32, i32
  }
  func.func @transform_3(%arg0: i32) -> (i32, i32) {
    %c0_i32 = arith.constant 0 : i32
    %c0_i32_0 = arith.constant 0 : i32
    %c0_i32_1 = arith.constant 0 : i32
    return %c0_i32, %c0_i32_0 : i32, i32
  }
  func.func @transform_4(%arg0: i32) -> (i32, i32) {
    %c0_i32 = arith.constant 0 : i32
    %c0_i32_0 = arith.constant 0 : i32
    return %arg0, %c0_i32 : i32, i32
  }
}

</mosaic_0001>

<llo_original>
// kernel: tpu_custom_call.1
$region0: #{tpu_custom_call.1}
  #allocation0 [shape = 'u32[]', space=smem, size = 0x4, offset = 0x4, fixed_abs, tag = 'smem constant byte address 0x4 - core index']
  #allocation1 [shape = 'u32[144,128]{1,0:T(1,128)}', space=vmem, size = 0x12000, scoped, tag = 'internal scratch']
  %s0 = inlined_call_operand.hbm [shape: f32[16,128], index: 0, kind: input, shape index: {}]
  %s1 = inlined_call_operand.hbm [shape: f32[128,512], index: 1, kind: input, shape index: {}]
  %s2 = inlined_call_operand.hbm [shape: f32[512,256], index: 2, kind: input, shape index: {}]
  %s3 = inlined_call_operand.vmem [shape: f32[1,256], index: 3, kind: input, shape index: {}]
  %s4 = inlined_call_operand.hbm [shape: f32[16,128], index: 4, kind: output, shape index: {}]
  %s5 = sld [smem:[#allocation0]]
  $region38: #{tpu_custom_call.1} parent=0
    _
  %s7 = ssub.s32 1, %s5
  %s8 = scalar_select 0, %s7, %s5
  $region1: #{tpu_custom_call.1} parent=0
    #allocation2 [shape = 'u8[8192]{0}', space=vmem, size = 0x2000, scoped, tag = 'input window, operand 0, single buffered']
    #allocation3 [shape = 's32[1]{0}', space=sflag, size = 0x4, scoped, tag = 'scoped memory for tpu_custom_call.1']
    #allocation4 [shape = 's32[1]{0}', space=sflag, size = 0x4, scoped, tag = 'scoped memory for tpu_custom_call.1']
    #allocation5 [shape = 'u8[262144]{0}', space=vmem, size = 0x40000, scoped, tag = 'input window, operand 1, single buffered']
    #allocation6 [shape = 's32[1]{0}', space=sflag, size = 0x4, scoped, tag = 'scoped memory for tpu_custom_call.1']
    #allocation7 [shape = 'u8[524288]{0}', space=vmem, size = 0x80000, scoped, tag = 'input window, operand 2, single buffered']
    #allocation8 [shape = 'u8[8192]{0}', space=vmem, size = 0x2000, scoped, tag = 'output window, operand 0, single buffered']
    %9 = vsyncpa [#allocation3], 0
    %10 = vsyncpa [#allocation6], 0
    %11 = vsyncpa [#allocation4], 0
    // Predicated region
    $region2: #{tpu_custom_call.1} parent=1 // pred_check
      _
    $region3: #{tpu_custom_call.1} parent=1 // pred_check_branch
      %13 = sbr.rel (0) target = $region5
    $region4: #{tpu_custom_call.1} parent=1 // pred_region
      %s15 = ssub.s32 256, 256
      %16 = vsyncadd [#allocation3], %s15
      %s17 = sshll.u32 [#allocation2], 4
      %s18 = int_to_ptr.vmem [resolvable:$true] %s17
      %23 = dma.hbm_to_vmem [thread:$0]  %s0, 256, %s18, [#allocation3], 128, 128, 8
    $region5: #{tpu_custom_call.1} parent=1 // pred_fallthru
      _
    // Predicated region
    $region6: #{tpu_custom_call.1} parent=1 // pred_check
      _
    $region7: #{tpu_custom_call.1} parent=1 // pred_check_branch
      %25 = sbr.rel (0) target = $region9
    $region8: #{tpu_custom_call.1} parent=1 // pred_region
      %s27 = ssub.s32 8192, 8192
      %28 = vsyncadd [#allocation6], %s27
      %s29 = sshll.u32 [#allocation5], 4
      %s30 = int_to_ptr.vmem [resolvable:$true] %s29
      %35 = dma.hbm_to_vmem [thread:$0]  %s1, 8192, %s30, [#allocation6], 512, 512, 32
    $region9: #{tpu_custom_call.1} parent=1 // pred_fallthru
      _
    // Predicated region
    $region10: #{tpu_custom_call.1} parent=1 // pred_check
      _
    $region11: #{tpu_custom_call.1} parent=1 // pred_check_branch
      %37 = sbr.rel (0) target = $region13
    $region12: #{tpu_custom_call.1} parent=1 // pred_region
      %s39 = ssub.s32 16384, 16384
      %40 = vsyncadd [#allocation6], %s39
      %s41 = sshll.u32 [#allocation7], 4
      %s42 = int_to_ptr.vmem [resolvable:$true] %s41
      %47 = dma.hbm_to_vmem [thread:$0]  %s2, 16384, %s42, [#allocation6], 256, 256, 16
    $region13: #{tpu_custom_call.1} parent=1 // pred_fallthru
      _
    // Predicated region
    $region14: #{tpu_custom_call.1} parent=1 // pred_check
      _
    $region15: #{tpu_custom_call.1} parent=1 // pred_check_branch
      %49 = sbr.rel (0) target = $region17
    $region16: #{tpu_custom_call.1} parent=1 // pred_region
      _
    $region17: #{tpu_custom_call.1} parent=1 // pred_fallthru
      _
    // Predicated region
    $region18: #{tpu_custom_call.1} parent=1 // pred_check
      _
    $region19: #{tpu_custom_call.1} parent=1 // pred_check_branch
      %51 = sbr.rel (0) target = $region21
    $region20: #{tpu_custom_call.1} parent=1 // pred_region
      %52 = dma.done [#allocation3], 256
    $region21: #{tpu_custom_call.1} parent=1 // pred_fallthru
      _
    // Predicated region
    $region22: #{tpu_custom_call.1} parent=1 // pred_check
      _
    $region23: #{tpu_custom_call.1} parent=1 // pred_check_branch
      %54 = sbr.rel (0) target = $region25
    $region24: #{tpu_custom_call.1} parent=1 // pred_region
      %55 = dma.done [#allocation6], 8192
    $region25: #{tpu_custom_call.1} parent=1 // pred_fallthru
      _
    // Predicated region
    $region26: #{tpu_custom_call.1} parent=1 // pred_check
      _
    $region27: #{tpu_custom_call.1} parent=1 // pred_check_branch
      %57 = sbr.rel (0) target = $region29
    $region28: #{tpu_custom_call.1} parent=1 // pred_region
      %58 = dma.done [#allocation6], 16384
    $region29: #{tpu_custom_call.1} parent=1 // pred_fallthru
      _
    %v59 = vld [vmem:[#allocation2] sm:$0xff]
    %v60 = vld [vmem:[#allocation2 + $0x8] sm:$0xff]
    %v61 = vld [vmem:[#allocation5] sm:$0xff]
    %v62 = vld [vmem:[#allocation5 + $0x8] sm:$0xff]
    %v63 = vld [vmem:[#allocation5 + $0x10] sm:$0xff]
    %v64 = vld [vmem:[#allocation5 + $0x18] sm:$0xff]
    %v65 = vld [vmem:[#allocation5 + $0x20] sm:$0xff]
    %v66 = vld [vmem:[#allocation5 + $0x28] sm:$0xff]
    %v67 = vld [vmem:[#allocation5 + $0x30] sm:$0xff]
    %v68 = vld [vmem:[#allocation5 + $0x38] sm:$0xff]
    %v69 = vld [vmem:[#allocation5 + $0x40] sm:$0xff]
    %v70 = vld [vmem:[#allocation5 + $0x48] sm:$0xff]
    %v71 = vld [vmem:[#allocation5 + $0x50] sm:$0xff]
    %v72 = vld [vmem:[#allocation5 + $0x58] sm:$0xff]
    %v73 = vld [vmem:[#allocation5 + $0x60] sm:$0xff]
    %v74 = vld [vmem:[#allocation5 + $0x68] sm:$0xff]
    %v75 = vld [vmem:[#allocation5 + $0x70] sm:$0xff]
    %v76 = vld [vmem:[#allocation5 + $0x78] sm:$0xff]
    %v77 = vld [vmem:[#allocation5 + $0x80] sm:$0xff]
    %v78 = vld [vmem:[#allocation5 + $0x88] sm:$0xff]
    %v79 = vld [vmem:[#allocation5 + $0x90] sm:$0xff]
    %v80 = vld [vmem:[#allocation5 + $0x98] sm:$0xff]
    %v81 = vld [vmem:[#allocation5 + $0xa0] sm:$0xff]
    %v82 = vld [vmem:[#allocation5 + $0xa8] sm:$0xff]
    %v83 = vld [vmem:[#allocation5 + $0xb0] sm:$0xff]
    %v84 = vld [vmem:[#allocation5 + $0xb8] sm:$0xff]
    %v85 = vld [vmem:[#allocation5 + $0xc0] sm:$0xff]
    %v86 = vld [vmem:[#allocation5 + $0xc8] sm:$0xff]
    %v87 = vld [vmem:[#allocation5 + $0xd0] sm:$0xff]
    %v88 = vld [vmem:[#allocation5 + $0xd8] sm:$0xff]
    %v89 = vld [vmem:[#allocation5 + $0xe0] sm:$0xff]
    %v90 = vld [vmem:[#allocation5 + $0xe8] sm:$0xff]
    %v91 = vld [vmem:[#allocation5 + $0xf0] sm:$0xff]
    %v92 = vld [vmem:[#allocation5 + $0xf8] sm:$0xff]
    %v93 = vld [vmem:[#allocation5 + $0x100] sm:$0xff]
    %v94 = vld [vmem:[#allocation5 + $0x108] sm:$0xff]
    %v95 = vld [vmem:[#allocation5 + $0x110] sm:$0xff]
    %v96 = vld [vmem:[#allocation5 + $0x118] sm:$0xff]
    %v97 = vld [vmem:[#allocation5 + $0x120] sm:$0xff]
    %v98 = vld [vmem:[#allocation5 + $0x128] sm:$0xff]
    %v99 = vld [vmem:[#allocation5 + $0x130] sm:$0xff]
    %v100 = vld [vmem:[#allocation5 + $0x138] sm:$0xff]
    %v101 = vld [vmem:[#allocation5 + $0x140] sm:$0xff]
    %v102 = vld [vmem:[#allocation5 + $0x148] sm:$0xff]
    %v103 = vld [vmem:[#allocation5 + $0x150] sm:$0xff]
    %v104 = vld [vmem:[#allocation5 + $0x158] sm:$0xff]
    %v105 = vld [vmem:[#allocation5 + $0x160] sm:$0xff]
    %v106 = vld [vmem:[#allocation5 + $0x168] sm:$0xff]
    %v107 = vld [vmem:[#allocation5 + $0x170] sm:$0xff]
    %v108 = vld [vmem:[#allocation5 + $0x178] sm:$0xff]
    %v109 = vld [vmem:[#allocation5 + $0x180] sm:$0xff]
    %v110 = vld [vmem:[#allocation5 + $0x188] sm:$0xff]
    %v111 = vld [vmem:[#allocation5 + $0x190] sm:$0xff]
    %v112 = vld [vmem:[#allocation5 + $0x198] sm:$0xff]
    %v113 = vld [vmem:[#allocation5 + $0x1a0] sm:$0xff]
    %v114 = vld [vmem:[#allocation5 + $0x1a8] sm:$0xff]
    %v115 = vld [vmem:[#allocation5 + $0x1b0] sm:$0xff]
    %v116 = vld [vmem:[#allocation5 + $0x1b8] sm:$0xff]
    %v117 = vld [vmem:[#allocation5 + $0x1c0] sm:$0xff]
    %v118 = vld [vmem:[#allocation5 + $0x1c8] sm:$0xff]
    %v119 = vld [vmem:[#allocation5 + $0x1d0] sm:$0xff]
    %v120 = vld [vmem:[#allocation5 + $0x1d8] sm:$0xff]
    %v121 = vld [vmem:[#allocation5 + $0x1e0] sm:$0xff]
    %v122 = vld [vmem:[#allocation5 + $0x1e8] sm:$0xff]
    %v123 = vld [vmem:[#allocation5 + $0x1f0] sm:$0xff]
    %v124 = vld [vmem:[#allocation5 + $0x1f8] sm:$0xff]
    %125 = vmatprep.subr.mxu0 %v122
    %126 = vmatpush1.msra.mxu0 %v121
    %127 = vmatprep.subr.mxu0 %v118
    %128 = vmatpush1.msra.mxu0 %v117
    %129 = vmatprep.subr.mxu0 %v114
    %130 = vmatpush1.msra.mxu0 %v113
    %131 = vmatprep.subr.mxu0 %v110
    %132 = vmatpush1.msra.mxu0 %v109
    %133 = vmatprep.subr.mxu0 %v106
    %134 = vmatpush1.msra.mxu0 %v105
    %135 = vmatprep.subr.mxu0 %v102
    %136 = vmatpush1.msra.mxu0 %v101
    %137 = vmatprep.subr.mxu0 %v98
    %138 = vmatpush1.msra.mxu0 %v97
    %139 = vmatprep.subr.mxu0 %v94
    %140 = vmatpush1.msra.mxu0 %v93
    %141 = vmatprep.subr.mxu0 %v90
    %142 = vmatpush1.msra.mxu0 %v89
    %143 = vmatprep.subr.mxu0 %v86
    %144 = vmatpush1.msra.mxu0 %v85
    %145 = vmatprep.subr.mxu0 %v82
    %146 = vmatpush1.msra.mxu0 %v81
    %147 = vmatprep.subr.mxu0 %v78
    %148 = vmatpush1.msra.mxu0 %v77
    %149 = vmatprep.subr.mxu0 %v74
    %150 = vmatpush1.msra.mxu0 %v73
    %151 = vmatprep.subr.mxu0 %v70
    %152 = vmatpush1.msra.mxu0 %v69
    %153 = vmatprep.subr.mxu0 %v66
    %154 = vmatpush1.msra.mxu0 %v65
    %155 = vmatprep.subr.mxu0 %v62
    %156 = vmatpush1.msra.mxu0 %v61
    %157 = vmatprep.subr.mxu0 0.0
    %158 = vmatpush2.msra.mxu0 0.0
    %159 = vmatprep.subr.mxu0 0.0
    %160 = vmatpush2.msra.mxu0 0.0
    %161 = vmatprep.subr.mxu0 0.0
    %162 = vmatpush2.msra.mxu0 0.0
    %163 = vmatprep.subr.mxu0 0.0
    %164 = vmatpush2.msra.mxu0 0.0
    %165 = vmatprep.subr.mxu0 0.0
    %166 = vmatpush2.msra.mxu0 0.0
    %167 = vmatprep.subr.mxu0 0.0
    %168 = vmatpush2.msra.mxu0 0.0
    %169 = vmatprep.subr.mxu0 0.0
    %170 = vmatpush2.msra.mxu0 0.0
    %171 = vmatprep.subr.mxu0 0.0
    %172 = vmatpush2.msra.mxu0 0.0
    %173 = vmatprep.subr.mxu0 0.0
    %174 = vmatpush2.msra.mxu0 0.0
    %175 = vmatprep.subr.mxu0 0.0
    %176 = vmatpush2.msra.mxu0 0.0
    %177 = vmatprep.subr.mxu0 0.0
    %178 = vmatpush2.msra.mxu0 0.0
    %179 = vmatprep.subr.mxu0 0.0
    %180 = vmatpush2.msra.mxu0 0.0
    %181 = vmatprep.subr.mxu0 0.0
    %182 = vmatpush2.msra.mxu0 0.0
    %183 = vmatprep.subr.mxu0 0.0
    %184 = vmatpush2.msra.mxu0 0.0
    %185 = vmatprep.subr.mxu0 0.0
    %186 = vmatpush2.msra.mxu0 0.0
    %187 = vmatprep.subr.mxu0 0.0
    %188 = vmatpush2.msra.mxu0 0.0
    %189 = vmatprep.mubr.f32.mxu0 0.0
    %190 = vmatmul.mubr.f32.gmra.mxu0 %v59
    %v191 = vpop.f32.mrf.mxu0
    %v192 = vadd.f32 0.0, %v191
    %v193 = vpop.f32.mrf.mxu0
    %v194 = vadd.f32 0.0, %v193
    %195 = vmatprep.mubr.f32.mxu0 0.0
    %196 = vmatmul.mubr.f32.gmra.mxu0 %v60
    %v197 = vpop.f32.mrf.mxu0
    %v198 = vadd.f32 0.0, %v197
    %v199 = vpop.f32.mrf.mxu0
    %v200 = vadd.f32 0.0, %v199
    %201 = vdwg.mxu0
    %202 = vmatprep.subr.mxu0 %v124
    %203 = vmatpush1.msra.mxu0 %v123
    %204 = vmatprep.subr.mxu0 %v120
    %205 = vmatpush1.msra.mxu0 %v119
    %206 = vmatprep.subr.mxu0 %v116
    %207 = vmatpush1.msra.mxu0 %v115
    %208 = vmatprep.subr.mxu0 %v112
    %209 = vmatpush1.msra.mxu0 %v111
    %210 = vmatprep.subr.mxu0 %v108
    %211 = vmatpush1.msra.mxu0 %v107
    %212 = vmatprep.subr.mxu0 %v104
    %213 = vmatpush1.msra.mxu0 %v103
    %214 = vmatprep.subr.mxu0 %v100
    %215 = vmatpush1.msra.mxu0 %v99
    %216 = vmatprep.subr.mxu0 %v96
    %217 = vmatpush1.msra.mxu0 %v95
    %218 = vmatprep.subr.mxu0 %v92
    %219 = vmatpush1.msra.mxu0 %v91
    %220 = vmatprep.subr.mxu0 %v88
    %221 = vmatpush1.msra.mxu0 %v87
    %222 = vmatprep.subr.mxu0 %v84
    %223 = vmatpush1.msra.mxu0 %v83
    %224 = vmatprep.subr.mxu0 %v80
    %225 = vmatpush1.msra.mxu0 %v79
    %226 = vmatprep.subr.mxu0 %v76
    %227 = vmatpush1.msra.mxu0 %v75
    %228 = vmatprep.subr.mxu0 %v72
    %229 = vmatpush1.msra.mxu0 %v71
    %230 = vmatprep.subr.mxu0 %v68
    %231 = vmatpush1.msra.mxu0 %v67
    %232 = vmatprep.subr.mxu0 %v64
    %233 = vmatpush1.msra.mxu0 %v63
    %234 = vmatprep.subr.mxu0 0.0
    %235 = vmatpush2.msra.mxu0 0.0
    %236 = vmatprep.subr.mxu0 0.0
    %237 = vmatpush2.msra.mxu0 0.0
    %238 = vmatprep.subr.mxu0 0.0
    %239 = vmatpush2.msra.mxu0 0.0
    %240 = vmatprep.subr.mxu0 0.0
    %241 = vmatpush2.msra.mxu0 0.0
    %242 = vmatprep.subr.mxu0 0.0
    %243 = vmatpush2.msra.mxu0 0.0
    %244 = vmatprep.subr.mxu0 0.0
    %245 = vmatpush2.msra.mxu0 0.0
    %246 = vmatprep.subr.mxu0 0.0
    %247 = vmatpush2.msra.mxu0 0.0
    %248 = vmatprep.subr.mxu0 0.0
    %249 = vmatpush2.msra.mxu0 0.0
    %250 = vmatprep.subr.mxu0 0.0
    %251 = vmatpush2.msra.mxu0 0.0
    %252 = vmatprep.subr.mxu0 0.0
    %253 = vmatpush2.msra.mxu0 0.0
    %254 = vmatprep.subr.mxu0 0.0
    %255 = vmatpush2.msra.mxu0 0.0
    %256 = vmatprep.subr.mxu0 0.0
    %257 = vmatpush2.msra.mxu0 0.0
    %258 = vmatprep.subr.mxu0 0.0
    %259 = vmatpush2.msra.mxu0 0.0
    %260 = vmatprep.subr.mxu0 0.0
    %261 = vmatpush2.msra.mxu0 0.0
    %262 = vmatprep.subr.mxu0 0.0
    %263 = vmatpush2.msra.mxu0 0.0
    %264 = vmatprep.subr.mxu0 0.0
    %265 = vmatpush2.msra.mxu0 0.0
    %266 = vmatprep.mubr.f32.mxu0 0.0
    %267 = vmatmul.mubr.f32.gmra.mxu0 %v59
    %v268 = vpop.f32.mrf.mxu0
    %v269 = vadd.f32 0.0, %v268
    %v270 = vpop.f32.mrf.mxu0
    %v271 = vadd.f32 0.0, %v270
    %272 = vmatprep.mubr.f32.mxu0 0.0
    %273 = vmatmul.mubr.f32.gmra.mxu0 %v60
    %v274 = vpop.f32.mrf.mxu0
    %v275 = vadd.f32 0.0, %v274
    %v276 = vpop.f32.mrf.mxu0
    %v277 = vadd.f32 0.0, %v276
    %278 = vdwg.mxu0
    %v279 = vld [vmem:[#allocation7] sm:$0xff]
    %v280 = vld [vmem:[#allocation7 + $0x8] sm:$0xff]
    %v281 = vld [vmem:[#allocation7 + $0x10] sm:$0xff]
    %v282 = vld [vmem:[#allocation7 + $0x18] sm:$0xff]
    %v283 = vld [vmem:[#allocation7 + $0x20] sm:$0xff]
    %v284 = vld [vmem:[#allocation7 + $0x28] sm:$0xff]
    %v285 = vld [vmem:[#allocation7 + $0x30] sm:$0xff]
    %v286 = vld [vmem:[#allocation7 + $0x38] sm:$0xff]
    %v287 = vld [vmem:[#allocation7 + $0x40] sm:$0xff]
    %v288 = vld [vmem:[#allocation7 + $0x48] sm:$0xff]
    %v289 = vld [vmem:[#allocation7 + $0x50] sm:$0xff]
    %v290 = vld [vmem:[#allocation7 + $0x58] sm:$0xff]
    %v291 = vld [vmem:[#allocation7 + $0x60] sm:$0xff]
    %v292 = vld [vmem:[#allocation7 + $0x68] sm:$0xff]
    %v293 = vld [vmem:[#allocation7 + $0x70] sm:$0xff]
    %v294 = vld [vmem:[#allocation7 + $0x78] sm:$0xff]
    %v295 = vld [vmem:[#allocation7 + $0x80] sm:$0xff]
    %v296 = vld [vmem:[#allocation7 + $0x88] sm:$0xff]
    %v297 = vld [vmem:[#allocation7 + $0x90] sm:$0xff]
    %v298 = vld [vmem:[#allocation7 + $0x98] sm:$0xff]
    %v299 = vld [vmem:[#allocation7 + $0xa0] sm:$0xff]
    %v300 = vld [vmem:[#allocation7 + $0xa8] sm:$0xff]
    %v301 = vld [vmem:[#allocation7 + $0xb0] sm:$0xff]
    %v302 = vld [vmem:[#allocation7 + $0xb8] sm:$0xff]
    %v303 = vld [vmem:[#allocation7 + $0xc0] sm:$0xff]
    %v304 = vld [vmem:[#allocation7 + $0xc8] sm:$0xff]
    %v305 = vld [vmem:[#allocation7 + $0xd0] sm:$0xff]
    %v306 = vld [vmem:[#allocation7 + $0xd8] sm:$0xff]
    %v307 = vld [vmem:[#allocation7 + $0xe0] sm:$0xff]
    %v308 = vld [vmem:[#allocation7 + $0xe8] sm:$0xff]
    %v309 = vld [vmem:[#allocation7 + $0xf0] sm:$0xff]
    %v310 = vld [vmem:[#allocation7 + $0xf8] sm:$0xff]
    %v311 = vld [vmem:[#allocation7 + $0x100] sm:$0xff]
    %v312 = vld [vmem:[#allocation7 + $0x108] sm:$0xff]
    %v313 = vld [vmem:[#allocation7 + $0x110] sm:$0xff]
    %v314 = vld [vmem:[#allocation7 + $0x118] sm:$0xff]
    %v315 = vld [vmem:[#allocation7 + $0x120] sm:$0xff]
    %v316 = vld [vmem:[#allocation7 + $0x128] sm:$0xff]
    %v317 = vld [vmem:[#allocation7 + $0x130] sm:$0xff]
    %v318 = vld [vmem:[#allocation7 + $0x138] sm:$0xff]
    %v319 = vld [vmem:[#allocation7 + $0x140] sm:$0xff]
    %v320 = vld [vmem:[#allocation7 + $0x148] sm:$0xff]
    %v321 = vld [vmem:[#allocation7 + $0x150] sm:$0xff]
    %v322 = vld [vmem:[#allocation7 + $0x158] sm:$0xff]
    %v323 = vld [vmem:[#allocation7 + $0x160] sm:$0xff]
    %v324 = vld [vmem:[#allocation7 + $0x168] sm:$0xff]
    %v325 = vld [vmem:[#allocation7 + $0x170] sm:$0xff]
    %v326 = vld [vmem:[#allocation7 + $0x178] sm:$0xff]
    %v327 = vld [vmem:[#allocation7 + $0x180] sm:$0xff]
    %v328 = vld [vmem:[#allocation7 + $0x188] sm:$0xff]
    %v329 = vld [vmem:[#allocation7 + $0x190] sm:$0xff]
    %v330 = vld [vmem:[#allocation7 + $0x198] sm:$0xff]
    %v331 = vld [vmem:[#allocation7 + $0x1a0] sm:$0xff]
    %v332 = vld [vmem:[#allocation7 + $0x1a8] sm:$0xff]
    %v333 = vld [vmem:[#allocation7 + $0x1b0] sm:$0xff]
    %v334 = vld [vmem:[#allocation7 + $0x1b8] sm:$0xff]
    %v335 = vld [vmem:[#allocation7 + $0x1c0] sm:$0xff]
    %v336 = vld [vmem:[#allocation7 + $0x1c8] sm:$0xff]
    %v337 = vld [vmem:[#allocation7 + $0x1d0] sm:$0xff]
    %v338 = vld [vmem:[#allocation7 + $0x1d8] sm:$0xff]
    %v339 = vld [vmem:[#allocation7 + $0x1e0] sm:$0xff]
    %v340 = vld [vmem:[#allocation7 + $0x1e8] sm:$0xff]
    %v341 = vld [vmem:[#allocation7 + $0x1f0] sm:$0xff]
    %v342 = vld [vmem:[#allocation7 + $0x1f8] sm:$0xff]
    %v343 = vld [vmem:[#allocation7 + $0x200] sm:$0xff]
    %v344 = vld [vmem:[#allocation7 + $0x208] sm:$0xff]
    %v345 = vld [vmem:[#allocation7 + $0x210] sm:$0xff]
    %v346 = vld [vmem:[#allocation7 + $0x218] sm:$0xff]
    %v347 = vld [vmem:[#allocation7 + $0x220] sm:$0xff]
    %v348 = vld [vmem:[#allocation7 + $0x228] sm:$0xff]
    %v349 = vld [vmem:[#allocation7 + $0x230] sm:$0xff]
    %v350 = vld [vmem:[#allocation7 + $0x238] sm:$0xff]
    %v351 = vld [vmem:[#allocation7 + $0x240] sm:$0xff]
    %v352 = vld [vmem:[#allocation7 + $0x248] sm:$0xff]
    %v353 = vld [vmem:[#allocation7 + $0x250] sm:$0xff]
    %v354 = vld [vmem:[#allocation7 + $0x258] sm:$0xff]
    %v355 = vld [vmem:[#allocation7 + $0x260] sm:$0xff]
    %v356 = vld [vmem:[#allocation7 + $0x268] sm:$0xff]
    %v357 = vld [vmem:[#allocation7 + $0x270] sm:$0xff]
    %v358 = vld [vmem:[#allocation7 + $0x278] sm:$0xff]
    %v359 = vld [vmem:[#allocation7 + $0x280] sm:$0xff]
    %v360 = vld [vmem:[#allocation7 + $0x288] sm:$0xff]
    %v361 = vld [vmem:[#allocation7 + $0x290] sm:$0xff]
    %v362 = vld [vmem:[#allocation7 + $0x298] sm:$0xff]
    %v363 = vld [vmem:[#allocation7 + $0x2a0] sm:$0xff]
    %v364 = vld [vmem:[#allocation7 + $0x2a8] sm:$0xff]
    %v365 = vld [vmem:[#allocation7 + $0x2b0] sm:$0xff]
    %v366 = vld [vmem:[#allocation7 + $0x2b8] sm:$0xff]
    %v367 = vld [vmem:[#allocation7 + $0x2c0] sm:$0xff]
    %v368 = vld [vmem:[#allocation7 + $0x2c8] sm:$0xff]
    %v369 = vld [vmem:[#allocation7 + $0x2d0] sm:$0xff]
    %v370 = vld [vmem:[#allocation7 + $0x2d8] sm:$0xff]
    %v371 = vld [vmem:[#allocation7 + $0x2e0] sm:$0xff]
    %v372 = vld [vmem:[#allocation7 + $0x2e8] sm:$0xff]
    %v373 = vld [vmem:[#allocation7 + $0x2f0] sm:$0xff]
    %v374 = vld [vmem:[#allocation7 + $0x2f8] sm:$0xff]
    %v375 = vld [vmem:[#allocation7 + $0x300] sm:$0xff]
    %v376 = vld [vmem:[#allocation7 + $0x308] sm:$0xff]
    %v377 = vld [vmem:[#allocation7 + $0x310] sm:$0xff]
    %v378 = vld [vmem:[#allocation7 + $0x318] sm:$0xff]
    %v379 = vld [vmem:[#allocation7 + $0x320] sm:$0xff]
    %v380 = vld [vmem:[#allocation7 + $0x328] sm:$0xff]
    %v381 = vld [vmem:[#allocation7 + $0x330] sm:$0xff]
    %v382 = vld [vmem:[#allocation7 + $0x338] sm:$0xff]
    %v383 = vld [vmem:[#allocation7 + $0x340] sm:$0xff]
    %v384 = vld [vmem:[#allocation7 + $0x348] sm:$0xff]
    %v385 = vld [vmem:[#allocation7 + $0x350] sm:$0xff]
    %v386 = vld [vmem:[#allocation7 + $0x358] sm:$0xff]
    %v387 = vld [vmem:[#allocation7 + $0x360] sm:$0xff]
    %v388 = vld [vmem:[#allocation7 + $0x368] sm:$0xff]
    %v389 = vld [vmem:[#allocation7 + $0x370] sm:$0xff]
    %v390 = vld [vmem:[#allocation7 + $0x378] sm:$0xff]
    %v391 = vld [vmem:[#allocation7 + $0x380] sm:$0xff]
    %v392 = vld [vmem:[#allocation7 + $0x388] sm:$0xff]
    %v393 = vld [vmem:[#allocation7 + $0x390] sm:$0xff]
    %v394 = vld [vmem:[#allocation7 + $0x398] sm:$0xff]
    %v395 = vld [vmem:[#allocation7 + $0x3a0] sm:$0xff]
    %v396 = vld [vmem:[#allocation7 + $0x3a8] sm:$0xff]
    %v397 = vld [vmem:[#allocation7 + $0x3b0] sm:$0xff]
    %v398 = vld [vmem:[#allocation7 + $0x3b8] sm:$0xff]
    %v399 = vld [vmem:[#allocation7 + $0x3c0] sm:$0xff]
    %v400 = vld [vmem:[#allocation7 + $0x3c8] sm:$0xff]
    %v401 = vld [vmem:[#allocation7 + $0x3d0] sm:$0xff]
    %v402 = vld [vmem:[#allocation7 + $0x3d8] sm:$0xff]
    %v403 = vld [vmem:[#allocation7 + $0x3e0] sm:$0xff]
    %v404 = vld [vmem:[#allocation7 + $0x3e8] sm:$0xff]
    %v405 = vld [vmem:[#allocation7 + $0x3f0] sm:$0xff]
    %v406 = vld [vmem:[#allocation7 + $0x3f8] sm:$0xff]
    %v407 = vld [vmem:[%s3] sm:$0x3]
    %v409 = vlaneseq
    %v410 = vshrl.u32 %v409, 7
    %v411 = vsub.s32 0, %v410
    %v412 = vrot.slane %v407, %v411
    %v413 = vlaneseq
    %v414 = vshrl.u32 %v413, 7
    %v415 = vsub.s32 1, %v414
    %v416 = vrot.slane %v407, %v415
    %419 = vmatprep.subr.mxu0 %v310
    %420 = vmatpush1.msra.mxu0 %v309
    %421 = vmatprep.subr.mxu0 %v308
    %422 = vmatpush1.msra.mxu0 %v307
    %423 = vmatprep.subr.mxu0 %v306
    %424 = vmatpush1.msra.mxu0 %v305
    %425 = vmatprep.subr.mxu0 %v304
    %426 = vmatpush1.msra.mxu0 %v303
    %427 = vmatprep.subr.mxu0 %v302
    %428 = vmatpush1.msra.mxu0 %v301
    %429 = vmatprep.subr.mxu0 %v300
    %430 = vmatpush1.msra.mxu0 %v299
    %431 = vmatprep.subr.mxu0 %v298
    %432 = vmatpush1.msra.mxu0 %v297
    %433 = vmatprep.subr.mxu0 %v296
    %434 = vmatpush1.msra.mxu0 %v295
    %435 = vmatprep.subr.mxu0 %v294
    %436 = vmatpush1.msra.mxu0 %v293
    %437 = vmatprep.subr.mxu0 %v292
    %438 = vmatpush1.msra.mxu0 %v291
    %439 = vmatprep.subr.mxu0 %v290
    %440 = vmatpush1.msra.mxu0 %v289
    %441 = vmatprep.subr.mxu0 %v288
    %442 = vmatpush1.msra.mxu0 %v287
    %443 = vmatprep.subr.mxu0 %v286
    %444 = vmatpush1.msra.mxu0 %v285
    %445 = vmatprep.subr.mxu0 %v284
    %446 = vmatpush1.msra.mxu0 %v283
    %447 = vmatprep.subr.mxu0 %v282
    %448 = vmatpush1.msra.mxu0 %v281
    %449 = vmatprep.subr.mxu0 %v280
    %450 = vmatpush1.msra.mxu0 %v279
    %451 = vmatprep.subr.mxu0 %v342
    %452 = vmatpush2.msra.mxu0 %v341
    %453 = vmatprep.subr.mxu0 %v340
    %454 = vmatpush2.msra.mxu0 %v339
    %455 = vmatprep.subr.mxu0 %v338
    %456 = vmatpush2.msra.mxu0 %v337
    %457 = vmatprep.subr.mxu0 %v336
    %458 = vmatpush2.msra.mxu0 %v335
    %459 = vmatprep.subr.mxu0 %v334
    %460 = vmatpush2.msra.mxu0 %v333
    %461 = vmatprep.subr.mxu0 %v332
    %462 = vmatpush2.msra.mxu0 %v331
    %463 = vmatprep.subr.mxu0 %v330
    %464 = vmatpush2.msra.mxu0 %v329
    %465 = vmatprep.subr.mxu0 %v328
    %466 = vmatpush2.msra.mxu0 %v327
    %467 = vmatprep.subr.mxu0 %v326
    %468 = vmatpush2.msra.mxu0 %v325
    %469 = vmatprep.subr.mxu0 %v324
    %470 = vmatpush2.msra.mxu0 %v323
    %471 = vmatprep.subr.mxu0 %v322
    %472 = vmatpush2.msra.mxu0 %v321
    %473 = vmatprep.subr.mxu0 %v320
    %474 = vmatpush2.msra.mxu0 %v319
    %475 = vmatprep.subr.mxu0 %v318
    %476 = vmatpush2.msra.mxu0 %v317
    %477 = vmatprep.subr.mxu0 %v316
    %478 = vmatpush2.msra.mxu0 %v315
    %479 = vmatprep.subr.mxu0 %v314
    %480 = vmatpush2.msra.mxu0 %v313
    %481 = vmatprep.subr.mxu0 %v312
    %482 = vmatpush2.msra.mxu0 %v311
    %483 = vmatprep.mubr.f32.mxu0 %v194
    %484 = vmatmul.mubr.f32.gmra.mxu0 %v192
    %v485 = vpop.f32.mrf.mxu0
    %v486 = vadd.f32 %v412, %v485
    %v487 = vpop.f32.mrf.mxu0
    %v488 = vadd.f32 %v416, %v487
    %489 = vmatprep.mubr.f32.mxu0 %v200
    %490 = vmatmul.mubr.f32.gmra.mxu0 %v198
    %v491 = vpop.f32.mrf.mxu0
    %v492 = vadd.f32 %v412, %v491
    %v493 = vpop.f32.mrf.mxu0
    %v494 = vadd.f32 %v416, %v493
    %495 = vdwg.mxu0
    %496 = vmatprep.subr.mxu0 %v374
    %497 = vmatpush1.msra.mxu0 %v373
    %498 = vmatprep.subr.mxu0 %v372
    %499 = vmatpush1.msra.mxu0 %v371
    %500 = vmatprep.subr.mxu0 %v370
    %501 = vmatpush1.msra.mxu0 %v369
    %502 = vmatprep.subr.mxu0 %v368
    %503 = vmatpush1.msra.mxu0 %v367
    %504 = vmatprep.subr.mxu0 %v366
    %505 = vmatpush1.msra.mxu0 %v365
    %506 = vmatprep.subr.mxu0 %v364
    %507 = vmatpush1.msra.mxu0 %v363
    %508 = vmatprep.subr.mxu0 %v362
    %509 = vmatpush1.msra.mxu0 %v361
    %510 = vmatprep.subr.mxu0 %v360
    %511 = vmatpush1.msra.mxu0 %v359
    %512 = vmatprep.subr.mxu0 %v358
    %513 = vmatpush1.msra.mxu0 %v357
    %514 = vmatprep.subr.mxu0 %v356
    %515 = vmatpush1.msra.mxu0 %v355
    %516 = vmatprep.subr.mxu0 %v354
    %517 = vmatpush1.msra.mxu0 %v353
    %518 = vmatprep.subr.mxu0 %v352
    %519 = vmatpush1.msra.mxu0 %v351
    %520 = vmatprep.subr.mxu0 %v350
    %521 = vmatpush1.msra.mxu0 %v349
    %522 = vmatprep.subr.mxu0 %v348
    %523 = vmatpush1.msra.mxu0 %v347
    %524 = vmatprep.subr.mxu0 %v346
    %525 = vmatpush1.msra.mxu0 %v345
    %526 = vmatprep.subr.mxu0 %v344
    %527 = vmatpush1.msra.mxu0 %v343
    %528 = vmatprep.subr.mxu0 %v406
    %529 = vmatpush2.msra.mxu0 %v405
    %530 = vmatprep.subr.mxu0 %v404
    %531 = vmatpush2.msra.mxu0 %v403
    %532 = vmatprep.subr.mxu0 %v402
    %533 = vmatpush2.msra.mxu0 %v401
    %534 = vmatprep.subr.mxu0 %v400
    %535 = vmatpush2.msra.mxu0 %v399
    %536 = vmatprep.subr.mxu0 %v398
    %537 = vmatpush2.msra.mxu0 %v397
    %538 = vmatprep.subr.mxu0 %v396
    %539 = vmatpush2.msra.mxu0 %v395
    %540 = vmatprep.subr.mxu0 %v394
    %541 = vmatpush2.msra.mxu0 %v393
    %542 = vmatprep.subr.mxu0 %v392
    %543 = vmatpush2.msra.mxu0 %v391
    %544 = vmatprep.subr.mxu0 %v390
    %545 = vmatpush2.msra.mxu0 %v389
    %546 = vmatprep.subr.mxu0 %v388
    %547 = vmatpush2.msra.mxu0 %v387
    %548 = vmatprep.subr.mxu0 %v386
    %549 = vmatpush2.msra.mxu0 %v385
    %550 = vmatprep.subr.mxu0 %v384
    %551 = vmatpush2.msra.mxu0 %v383
    %552 = vmatprep.subr.mxu0 %v382
    %553 = vmatpush2.msra.mxu0 %v381
    %554 = vmatprep.subr.mxu0 %v380
    %555 = vmatpush2.msra.mxu0 %v379
    %556 = vmatprep.subr.mxu0 %v378
    %557 = vmatpush2.msra.mxu0 %v377
    %558 = vmatprep.subr.mxu0 %v376
    %559 = vmatpush2.msra.mxu0 %v375
    %560 = vmatprep.mubr.f32.mxu0 %v271
    %561 = vmatmul.mubr.f32.gmra.mxu0 %v269
    %v562 = vpop.f32.mrf.mxu0
    %v563 = vadd.f32 %v486, %v562
    %v564 = vpop.f32.mrf.mxu0
    %v565 = vadd.f32 %v488, %v564
    %566 = vmatprep.mubr.f32.mxu0 %v277
    %567 = vmatmul.mubr.f32.gmra.mxu0 %v275
    %v568 = vpop.f32.mrf.mxu0
    %v569 = vadd.f32 %v492, %v568
    %v570 = vpop.f32.mrf.mxu0
    %v571 = vadd.f32 %v494, %v570
    %572 = vdwg.mxu0
    %v573 = vxor.u32 %v563, 2147483648
    %v574 = vxor.u32 %v569, 2147483648
    %v575 = vmul.f32 %v573, 1.442695
    %v576 = vpow.pop %v575
    %v577 = vmul.f32 %v574, 1.442695
    %v578 = vpow.pop %v577
    %v579 = vadd.f32 %v576, 1.0
    %v580 = vadd.f32 %v578, 1.0
    %v581 = vrcp.pop %v579
    %v582 = vmul.f32 1.0, %v581
    %v583 = vrcp.pop %v580
    %v584 = vmul.f32 1.0, %v583
    %v585 = vsub.f32 %v565, %v59
    %v586 = vsub.f32 %v571, %v60
    %v587 = vmul.f32 %v582, %v585
    %v588 = vmul.f32 %v584, %v586
    %v589 = vadd.f32 %v59, %v587
    %v590 = vadd.f32 %v60, %v588
    %591 = vst [vmem:[#allocation8] sm:$0xff] %v589
    %592 = vst [vmem:[#allocation8 + $0x8] sm:$0xff] %v590
    // Predicated region
    $region30: #{tpu_custom_call.1} parent=1 // pred_check
      _
    $region31: #{tpu_custom_call.1} parent=1 // pred_check_branch
      %594 = sbr.rel (0) target = $region33
    $region32: #{tpu_custom_call.1} parent=1 // pred_region
      %s596 = ssub.s32 256, 256
      %597 = vsyncadd [#allocation4], %s596
      %s598 = sshll.u32 [#allocation8], 4
      %s599 = int_to_ptr.vmem [resolvable:$true] %s598
      %604 = dma.vmem_to_hbm [thread:$0]  %s599, 256, %s4, [#allocation4], 128, 128, 8
    $region33: #{tpu_custom_call.1} parent=1 // pred_fallthru
      _
    // Predicated region
    $region34: #{tpu_custom_call.1} parent=1 // pred_check
      _
    $region35: #{tpu_custom_call.1} parent=1 // pred_check_branch
      %606 = sbr.rel (0) target = $region37
    $region36: #{tpu_custom_call.1} parent=1 // pred_region
      %607 = dma.done [#allocation4], 256
    $region37: #{tpu_custom_call.1} parent=1 // pred_fallthru
      _
    %608 = vsyncpa [#allocation3], 1
    %609 = vsyncpa [#allocation6], 1
    %610 = vsyncpa [#allocation4], 1

</llo_original>
